<compile_context>
chip_gen: v5e
topology: v5e:2x2
jax: 0.10.0
libtpu: 0.0.40
codegen_flags: <defaults>
</compile_context>

<pallas_src>
import jax
import jax.numpy as jnp
from jax.experimental import pallas as pl
from jax.experimental.pallas import tpu as pltpu


def _round_up(x, m):
    return (x + m - 1) // m * m


def _pick_batch_tile(B, N, target_rows):
    """Rows per MXU call ~ target_rows, prefer divisors of B, keep >=2 grid steps."""
    cap = max(1, min(B, target_rows // max(N, 1)))
    tb = cap
    # Prefer an exact divisor of B within [cap/2, cap] to avoid batch padding.
    lo = max(cap // 2, 1)
    for cand in range(cap, lo - 1, -1):
        if B % cand == 0:
            tb = cand
            break
    # Keep at least 2 grid steps when possible (v7x has 2 TensorCores per chip).
    while tb > 1 and -(-B // tb) < 2:
        tb = max(1, tb // 2)
    return tb


def patch_encoder_kernel(patch_ref, w_ref, posb_ref, out_ref):
    # patch_ref: (TB, N, D) f32   w_ref: (D, Pp) bf16
    # posb_ref : (N, Pp)    f32   out_ref: (TB, N, Pp) f32
    TB, N, D = patch_ref.shape
    Pp = w_ref.shape[1]

    # Fold the per-step batch chunk into the matmul M dimension: one big
    # (TB*N, D) x (D, Pp) MXU matmul. bf16 operands, f32 accumulation.
    x = patch_ref[...].reshape(TB * N, D).astype(jnp.bfloat16)
    proj = jnp.dot(x, w_ref[...], preferred_element_type=jnp.float32)   # (TB*N, Pp) f32

    # Bias is already folded into posb (done once in the wrapper); add in f32.
    enc = proj.reshape(TB, N, Pp) + posb_ref[...][None, :, :]
    out_ref[...] = enc.astype(out_ref.dtype)


def patch_encoder(patch, weight, bias, pos_embed, *, target_rows=256):
    """patch: (B, N, D); weight: (D, P); bias: (P,); pos_embed: (N, P) -> (B, N, P)."""
    B, N, D = patch.shape
    P = weight.shape[1]

    # ---- one-time wrapper prep (shared across the whole grid) ----
    # Fold the Linear bias into the positional-embedding table.
    pos_plus_bias = (pos_embed + bias[None, :]).astype(jnp.float32)       # (N, P)
    # Cast the weight once for the bf16 MXU matmul.
    w_bf16 = weight.astype(jnp.bfloat16)                                  # (D, P)
    # Lane-dense output: pad P up to a multiple of 128 only if needed.
    Pp = _round_up(P, 128)
    if Pp != P:
        w_bf16 = jnp.pad(w_bf16, ((0, 0), (0, Pp - P)))
        pos_plus_bias = jnp.pad(pos_plus_bias, ((0, 0), (0, Pp - P)))

    # Batch chunking (see _pick_batch_tile); pad batch only if no clean divisor.
    TB = _pick_batch_tile(B, N, target_rows)
    Bp = _round_up(B, TB)
    if Bp != B:
        patch = jnp.pad(patch, ((0, Bp - B), (0, 0), (0, 0)))

    grid = (Bp // TB,)

    # NOTE: for large real shapes (e.g. N=196, D=P=768) per-step VMEM footprint is
    # ~3 MiB — comfortably within the default scoped limit on v5e/v6e/v7x.
    out = pl.pallas_call(
        patch_encoder_kernel,
        out_shape=jax.ShapeDtypeStruct((Bp, N, Pp), patch.dtype),
        grid_spec=pltpu.PrefetchScalarGridSpec(
            num_scalar_prefetch=0,
            grid=grid,
            in_specs=[
                pl.BlockSpec((TB, N, D), lambda i: (i, 0, 0)),   # streamed patch chunk
                pl.BlockSpec((D, Pp), lambda i: (0, 0)),         # resident weight (constant block)
                pl.BlockSpec((N, Pp), lambda i: (0, 0)),         # resident pos_embed + bias
            ],
            out_specs=pl.BlockSpec((TB, N, Pp), lambda i: (i, 0, 0)),
        ),
        compiler_params=pltpu.CompilerParams(
            dimension_semantics=("parallel",),
        ),
    )(patch, w_bf16, pos_plus_bias)

    # Strip the batch / proj_dim padding (no-op when nothing was padded).
    if Bp != B or Pp != P:
        out = out[:B, :, :P]
    return out


def reference(patch, weight, bias, pos_embed):
    return jnp.einsum("bnd,dp->bnp", patch, weight) + bias[None, None, :] + pos_embed[None, :, :]


if __name__ == "__main__":
    # Small shapes implied by the module: batch=2, patchnum=8, patch_dim=16, proj_dim=32
    B, N, D, P = 2, 8, 16, 32

    key = jax.random.PRNGKey(0)
    k_patch, k_w, k_b, k_pos = jax.random.split(key, 4)

    patch = jax.random.normal(k_patch, (B, N, D), dtype=jnp.float32)
    # Deterministic parameter init (synthetic, not a checkpoint load)
    weight = jax.random.normal(k_w, (D, P), dtype=jnp.float32) * 0.02       # Linear weight (pre-transposed)
    bias = jax.random.normal(k_b, (P,), dtype=jnp.float32) * 0.02           # Linear bias
    pos_embed = jax.random.normal(k_pos, (N, P), dtype=jnp.float32) * 0.02  # Embedding table

    out = jax.block_until_ready(patch_encoder(patch, weight, bias, pos_embed))

    ref = reference(patch, weight, bias, pos_embed)
    assert out.shape == (B, N, P)
    # bf16 matmul operands (f32 accumulation): looser tolerance than a pure-f32 kernel.
    assert jnp.allclose(out, ref, atol=1e-2, rtol=1e-2)

    print("KERNEL_OK")
</pallas_src>

<mosaic_0001>
module attributes {stable_mosaic.version = 11 : i64} {
  func.func @patch_encoder_kernel(%arg0: i32, %arg1: memref<1x8x16xf32, #tpu.memory_space<vmem>>, %arg2: memref<16x128xbf16, #tpu.memory_space<vmem>>, %arg3: memref<8x128xf32, #tpu.memory_space<vmem>>, %arg4: memref<1x8x128xf32, #tpu.memory_space<vmem>>) attributes {dimension_semantics = [#tpu.dimension_semantics<parallel>], iteration_bounds = array<i64: 2>, scalar_prefetch = 0 : i64, scratch_operands = 0 : i64, tpu.core_type = #tpu.core_type<tc>, window_params = [{transform_indices = @transform_0, window_bounds = array<i64: 1, 8, 16>}, {pipeline_mode = #tpu.pipeline_mode<synchronous>, transform_indices = @transform_1, window_bounds = array<i64: 16, 128>}, {pipeline_mode = #tpu.pipeline_mode<synchronous>, transform_indices = @transform_2, window_bounds = array<i64: 8, 128>}, {transform_indices = @transform_3, window_bounds = array<i64: 1, 8, 128>}]} {
    %c0 = arith.constant 0 : index
    %c0_0 = arith.constant 0 : index
    %c0_1 = arith.constant 0 : index
    %0 = vector.load %arg1[%c0, %c0_0, %c0_1] : memref<1x8x16xf32, #tpu.memory_space<vmem>>, vector<1x8x16xf32>
    %1 = vector.shape_cast %0 : vector<1x8x16xf32> to vector<8x16xf32>
    %2 = arith.truncf %1 : vector<8x16xf32> to vector<8x16xbf16>
    %c0_2 = arith.constant 0 : index
    %c0_3 = arith.constant 0 : index
    %3 = vector.load %arg2[%c0_2, %c0_3] : memref<16x128xbf16, #tpu.memory_space<vmem>>, vector<16x128xbf16>
    %cst = arith.constant dense<0.000000e+00> : vector<8x128xf32>
    %4 = tpu.matmul %2, %3, %cst {dimension_numbers = #tpu.dot_dimension_numbers<[1], [0], [0], [1], [0, 0, 1, 1], [], []>} : vector<8x16xbf16>, vector<16x128xbf16>, vector<8x128xf32> -> vector<8x128xf32>
    %5 = vector.shape_cast %4 : vector<8x128xf32> to vector<1x8x128xf32>
    %c0_4 = arith.constant 0 : index
    %c0_5 = arith.constant 0 : index
    %6 = vector.load %arg3[%c0_4, %c0_5] : memref<8x128xf32, #tpu.memory_space<vmem>>, vector<8x128xf32>
    %7 = vector.shape_cast %6 : vector<8x128xf32> to vector<1x8x128xf32>
    %8 = arith.addf %5, %7 : vector<1x8x128xf32>
    %c0_6 = arith.constant 0 : index
    %c0_7 = arith.constant 0 : index
    %c0_8 = arith.constant 0 : index
    %9 = vector.load %arg4[%c0_6, %c0_7, %c0_8] : memref<1x8x128xf32, #tpu.memory_space<vmem>>, vector<1x8x128xf32>
    tpu.vector_store %arg4[%c0_6, %c0_7, %c0_8], %8 {strides = array<i32>} : memref<1x8x128xf32, #tpu.memory_space<vmem>>, vector<1x8x128xf32>,
    return
  }
  func.func @transform_0(%arg0: i32) -> (i32, i32, i32) {
    %c0_i32 = arith.constant 0 : i32
    %c0_i32_0 = arith.constant 0 : i32
    %c0_i32_1 = arith.constant 0 : i32
    return %arg0, %c0_i32, %c0_i32_0 : i32, i32, i32
  }
  func.func @transform_1(%arg0: i32) -> (i32, i32) {
    %c0_i32 = arith.constant 0 : i32
    %c0_i32_0 = arith.constant 0 : i32
    %c0_i32_1 = arith.constant 0 : i32
    return %c0_i32, %c0_i32_0 : i32, i32
  }
  func.func @transform_2(%arg0: i32) -> (i32, i32) {
    %c0_i32 = arith.constant 0 : i32
    %c0_i32_0 = arith.constant 0 : i32
    %c0_i32_1 = arith.constant 0 : i32
    return %c0_i32, %c0_i32_0 : i32, i32
  }
  func.func @transform_3(%arg0: i32) -> (i32, i32, i32) {
    %c0_i32 = arith.constant 0 : i32
    %c0_i32_0 = arith.constant 0 : i32
    %c0_i32_1 = arith.constant 0 : i32
    return %arg0, %c0_i32, %c0_i32_0 : i32, i32, i32
  }
}

</mosaic_0001>

<llo_original>
// kernel: tpu_custom_call.1
$region0: #{tpu_custom_call.1}
  #allocation0 [shape = 'u32[]', space=smem, size = 0x4, offset = 0x4, fixed_abs, tag = 'smem constant byte address 0x4 - core index']
  #allocation1 [shape = 'u32[72,128]{1,0:T(1,128)}', space=vmem, size = 0x9000, scoped, tag = 'internal scratch']
  %s0 = inlined_call_operand.hbm [shape: f32[2,8,16], index: 0, kind: input, shape index: {}]
  %s1 = inlined_call_operand.hbm [shape: bf16[16,128], index: 1, kind: input, shape index: {}]
  %s2 = inlined_call_operand.hbm [shape: f32[8,128], index: 2, kind: input, shape index: {}]
  %s3 = inlined_call_operand.hbm [shape: f32[2,8,128], index: 3, kind: output, shape index: {}]
  %s4 = sld [smem:[#allocation0]]
  $region57: #{tpu_custom_call.1} parent=0
    _
  %s6 = ssub.s32 1, %s4
  %s7 = scalar_select 0, %s6, %s4
  $region1: #{tpu_custom_call.1} parent=0
    #allocation2 [shape = 'u8[8192]{0}', space=vmem, size = 0x2000, scoped, tag = 'input window, operand 0']
    #allocation3 [shape = 's32[2]{0}', space=sflag, size = 0x8, scoped, tag = 'scoped memory for tpu_custom_call.1']
    #allocation4 [shape = 's32[2]{0}', space=sflag, size = 0x8, scoped, tag = 'scoped memory for tpu_custom_call.1']
    #allocation5 [shape = 'u8[4096]{0}', space=vmem, size = 0x1000, scoped, tag = 'input window, operand 1, single buffered']
    #allocation6 [shape = 's32[1]{0}', space=sflag, size = 0x4, scoped, tag = 'scoped memory for tpu_custom_call.1']
    #allocation7 [shape = 'u8[4096]{0}', space=vmem, size = 0x1000, scoped, tag = 'input window, operand 2, single buffered']
    #allocation8 [shape = 'u8[8192]{0}', space=vmem, size = 0x2000, scoped, tag = 'output window, operand 0']
    %8 = vsyncpa [#allocation3], 0
    %s9 = scalar_lea.sflag [#allocation3], 1
    %10 = vsyncpa %s9, 0
    %11 = vsyncpa [#allocation6], 0
    %12 = vsyncpa [#allocation4], 0
    %s13 = scalar_lea.sflag [#allocation4], 1
    %14 = vsyncpa %s13, 0
    loop: start=0, step=1, limit=4
    $region2: #{tpu_custom_call.1} parent=1 // loop_pre_header
      _
    $region3: #{tpu_custom_call.1} parent=1 // loop_header
      %s16 = sphi 0, %s20
      %p17 = scmp.ge.s32.totalorder %s16, 4
      %s26 = sphi 0, %s28
      %s29 = sphi 0, %s26
      %s30 = sphi 0, %s29
      %s46 = sphi 0, %s30
      %s50 = sphi 0, %s50
      %s52 = sphi 0, %s50
      %s53 = sphi 0, %s52
      %s67 = sphi 0, %s53
      %s71 = sphi 0, %s71
      %s73 = sphi 0, %s71
      %s74 = sphi 0, %s73
      %s88 = sphi 0, %s74
      %s94 = sphi 0, %s96
      %s97 = sphi 0, %s94
      %s98 = sphi 0, %s97
      %s114 = sphi 0, %s98
    $region4: #{tpu_custom_call.1} parent=1 // loop_header_branch
      %19 = sbr.rel (%p17) target = $region8
    $region5: #{tpu_custom_call.1} parent=1 // loop_body
      %s21 = ssub.s32 %s16, 1
      %s22 = ssub.s32 %s16, 2
      %s23 = sadd.s32 %s16, 1
      %s24 = ssub.s32 %s16, %s23
      %p25 = scmp.eq.s32.totalorder %s24, 0
      %s27 = sadd.s32 %s26, 1
      %s28 = scalar_select %p25, %s26, %s27
      %p31 = pneg %p25
      %p32 = scmp.eq.s32.totalorder %s16, 1
      %p33 = por %p31, %p32
      %p34 = scmp.ne.s32.totalorder %s26, %s29
      %p35 = scmp.eq.s32.totalorder %s16, 0
      %p36 = por %p34, %p35
      %p37 = scmp.ne.s32.totalorder %s26, %s29
      %p38 = scmp.eq.s32.totalorder %s21, 1
      %p39 = por %p37, %p38
      %p40 = scmp.ne.s32.totalorder %s29, %s30
      %p41 = scmp.eq.s32.totalorder %s21, 0
      %p42 = por %p40, %p41
      %p43 = scmp.ne.s32.totalorder %s29, %s30
      %p44 = scmp.eq.s32.totalorder %s22, 1
      %p45 = por %p43, %p44
      %p47 = scmp.ne.s32.totalorder %s30, %s46
      %p48 = scmp.eq.s32.totalorder %s22, 0
      %p49 = por %p47, %p48
      %s51 = sadd.s32 %s50, 1
      %p54 = scmp.eq.s32.totalorder %s16, 1
      %p55 = scmp.ne.s32.totalorder %s50, %s52
      %p56 = scmp.eq.s32.totalorder %s16, 0
      %p57 = por %p55, %p56
      %p58 = scmp.ne.s32.totalorder %s50, %s52
      %p59 = scmp.eq.s32.totalorder %s21, 1
      %p60 = por %p58, %p59
      %p61 = scmp.ne.s32.totalorder %s52, %s53
      %p62 = scmp.eq.s32.totalorder %s21, 0
      %p63 = por %p61, %p62
      %p64 = scmp.ne.s32.totalorder %s52, %s53
      %p65 = scmp.eq.s32.totalorder %s22, 1
      %p66 = por %p64, %p65
      %p68 = scmp.ne.s32.totalorder %s53, %s67
      %p69 = scmp.eq.s32.totalorder %s22, 0
      %p70 = por %p68, %p69
      %s72 = sadd.s32 %s71, 1
      %p75 = scmp.eq.s32.totalorder %s16, 1
      %p76 = scmp.ne.s32.totalorder %s71, %s73
      %p77 = scmp.eq.s32.totalorder %s16, 0
      %p78 = por %p76, %p77
      %p79 = scmp.ne.s32.totalorder %s71, %s73
      %p80 = scmp.eq.s32.totalorder %s21, 1
      %p81 = por %p79, %p80
      %p82 = scmp.ne.s32.totalorder %s73, %s74
      %p83 = scmp.eq.s32.totalorder %s21, 0
      %p84 = por %p82, %p83
      %p85 = scmp.ne.s32.totalorder %s73, %s74
      %p86 = scmp.eq.s32.totalorder %s22, 1
      %p87 = por %p85, %p86
      %p89 = scmp.ne.s32.totalorder %s74, %s88
      %p90 = scmp.eq.s32.totalorder %s22, 0
      %p91 = por %p89, %p90
      %s92 = ssub.s32 %s16, %s23
      %p93 = scmp.eq.s32.totalorder %s92, 0
      %s95 = sadd.s32 %s94, 1
      %s96 = scalar_select %p93, %s94, %s95
      %p99 = pneg %p93
      %p100 = scmp.eq.s32.totalorder %s16, 1
      %p101 = por %p99, %p100
      %p102 = scmp.ne.s32.totalorder %s94, %s97
      %p103 = scmp.eq.s32.totalorder %s16, 0
      %p104 = por %p102, %p103
      %p105 = scmp.ne.s32.totalorder %s94, %s97
      %p106 = scmp.eq.s32.totalorder %s21, 1
      %p107 = por %p105, %p106
      %p108 = scmp.ne.s32.totalorder %s97, %s98
      %p109 = scmp.eq.s32.totalorder %s21, 0
      %p110 = por %p108, %p109
      %p111 = scmp.ne.s32.totalorder %s97, %s98
      %p112 = scmp.eq.s32.totalorder %s22, 1
      %p113 = por %p111, %p112
      %p115 = scmp.ne.s32.totalorder %s98, %s114
      %p116 = scmp.eq.s32.totalorder %s22, 0
      %p117 = por %p115, %p116
      %p118 = scmp.le.s32.totalorder 1, %s16
      %p119 = scmp.lt.s32.totalorder %s16, 3
      %p120 = pnand %p118, %p119
      %p121 = pneg %p120
      // Predicated region
      $region9: #{tpu_custom_call.1} parent=5 // pred_check
        _
      $region10: #{tpu_custom_call.1} parent=5 // pred_check_branch
        %123 = sbr.rel (%p120) target = $region12
      $region11: #{tpu_custom_call.1} parent=5 // pred_region
        %s124 = ssub.s32 %s16, 1
        // Predicated region
        $region13: #{tpu_custom_call.1} parent=11 // pred_check
          %p125 = pneg %p63
        $region14: #{tpu_custom_call.1} parent=11 // pred_check_branch
          %127 = sbr.rel (%p125) target = $region16
        $region15: #{tpu_custom_call.1} parent=11 // pred_region
          %129 = vsyncadd [#allocation6], 0
          %s130 = sshll.u32 %s1, 4
          %s131 = int_to_ptr.hbm [resolvable:$true] %s130
          %s132 = sshll.u32 [#allocation5], 4
          %s133 = int_to_ptr.vmem [resolvable:$true] %s132
          %138 = dma.hbm_to_vmem [thread:$0]  %s131, 128, %s133, [#allocation6], 64, 64, 4
        $region16: #{tpu_custom_call.1} parent=11 // pred_fallthru
          _
        // Predicated region
        $region17: #{tpu_custom_call.1} parent=11 // pred_check
          %p139 = pneg %p84
        $region18: #{tpu_custom_call.1} parent=11 // pred_check_branch
          %141 = sbr.rel (%p139) target = $region20
        $region19: #{tpu_custom_call.1} parent=11 // pred_region
          %143 = vsyncadd [#allocation6], 0
          %s145 = sshll.u32 %s2, 4
          %s146 = int_to_ptr.hbm [resolvable:$true] %s145
          %s147 = sshll.u32 [#allocation7], 4
          %s148 = int_to_ptr.vmem [resolvable:$true] %s147
          %150 = dma.hbm_to_vmem [thread:$0]  %s146, 128, %s148, [#allocation6]
        $region20: #{tpu_custom_call.1} parent=11 // pred_fallthru
          _
      $region12: #{tpu_custom_call.1} parent=5 // pred_fallthru
        _
      %p151 = scmp.lt.s32.totalorder %s16, 2
      // Predicated region
      $region21: #{tpu_custom_call.1} parent=5 // pred_check
        %p152 = pneg %p151
      $region22: #{tpu_custom_call.1} parent=5 // pred_check_branch
        %154 = sbr.rel (%p152) target = $region24
      $region23: #{tpu_custom_call.1} parent=5 // pred_region
        // Predicated region
        $region25: #{tpu_custom_call.1} parent=23 // pred_check
          %p155 = pneg %p36
        $region26: #{tpu_custom_call.1} parent=23 // pred_check_branch
          %157 = sbr.rel (%p155) target = $region28
        $region27: #{tpu_custom_call.1} parent=23 // pred_region
          %s158 = sand.u32 %s26, 1
          %s159 = scalar_lea.sflag [#allocation3], %s158
          %s160 = sand.u32 %s26, 1
          %s161 = smul.addr %s160, 8
          %s162 = scalar_lea.vmem [#allocation2], %s161
          %164 = vsyncadd %s159, 0
          %s165 = smul.addr %s16, 8
          %s166 = scalar_lea.hbm %s0, %s165
          %s168 = sshll.u32 %s166, 4
          %s169 = int_to_ptr.hbm [resolvable:$true] %s168
          %s170 = sshll.u32 %s162, 4
          %s171 = int_to_ptr.vmem [resolvable:$true] %s170
          %173 = dma.hbm_to_vmem [thread:$0]  %s169, 128, %s171, %s159
        $region28: #{tpu_custom_call.1} parent=23 // pred_fallthru
          _
      $region24: #{tpu_custom_call.1} parent=5 // pred_fallthru
        _
      %p174 = scmp.le.s32.totalorder 1, %s16
      %p175 = scmp.lt.s32.totalorder %s16, 3
      %p176 = pnand %p174, %p175
      %p177 = pneg %p176
      // Predicated region
      $region29: #{tpu_custom_call.1} parent=5 // pred_check
        _
      $region30: #{tpu_custom_call.1} parent=5 // pred_check_branch
        %179 = sbr.rel (%p176) target = $region32
      $region31: #{tpu_custom_call.1} parent=5 // pred_region
        %s180 = ssub.s32 %s16, 1
        %s181 = sand.u32 %s29, 1
        %s182 = scalar_lea.sflag [#allocation3], %s181
        %s183 = sand.u32 %s29, 1
        %s184 = smul.addr %s183, 8
        %s185 = scalar_lea.vmem [#allocation2], %s184
        // Predicated region
        $region33: #{tpu_custom_call.1} parent=31 // pred_check
          %p186 = pneg %p42
        $region34: #{tpu_custom_call.1} parent=31 // pred_check_branch
          %188 = sbr.rel (%p186) target = $region36
        $region35: #{tpu_custom_call.1} parent=31 // pred_region
          %190 = dma.done %s182, 128
        $region36: #{tpu_custom_call.1} parent=31 // pred_fallthru
          _
        // Predicated region
        $region37: #{tpu_custom_call.1} parent=31 // pred_check
          %p191 = pneg %p63
        $region38: #{tpu_custom_call.1} parent=31 // pred_check_branch
          %193 = sbr.rel (%p191) target = $region40
        $region39: #{tpu_custom_call.1} parent=31 // pred_region
          %195 = dma.done [#allocation6], 128
        $region40: #{tpu_custom_call.1} parent=31 // pred_fallthru
          _
        // Predicated region
        $region41: #{tpu_custom_call.1} parent=31 // pred_check
          %p196 = pneg %p84
        $region42: #{tpu_custom_call.1} parent=31 // pred_check_branch
          %198 = sbr.rel (%p196) target = $region44
        $region43: #{tpu_custom_call.1} parent=31 // pred_region
          %200 = dma.done [#allocation6], 128
        $region44: #{tpu_custom_call.1} parent=31 // pred_fallthru
          _
        %s201 = sand.u32 %s29, 1
        %s202 = scalar_lea.sflag [#allocation3], %s201
        %s203 = sand.u32 %s29, 1
        %s204 = smul.addr %s203, 8
        %s205 = scalar_lea.vmem [#allocation2], %s204
        %p206 = pneg %p42
        %p207 = pneg %p39
        %p208 = pneg %p63
        %p209 = pneg %p60
        %p210 = pneg %p84
        %p211 = pneg %p81
        %p212 = pneg %p110
        %p213 = pneg %p107
        %s214 = sand.u32 %s97, 1
        %s215 = scalar_lea.sflag [#allocation4], %s214
        %s216 = sand.u32 %s97, 1
        %s217 = smul.addr %s216, 8
        %s218 = scalar_lea.vmem [#allocation8], %s217
        %v220 = vld [vmem:[%s185] sm:$0xff]
        %v221 = vpack.c.bf16 %v220, %v220
        %v222 = vld [vmem:[#allocation5] sm:$0xf]
        %v223 = vld [vmem:[#allocation5 + $0x4] sm:$0xf]
        %v226 = vunpack.c.l.b16 %v222
        %v227 = vunpack.c.l.b16 %v223
        %v228 = vpack.c.b16 %v227, %v226
        %vm230 = vcmask 130048
        %v232 = vsel %vm230, %v221, 0
        %234 = vmatpush.bf16.msra.mxu0 0
        %235 = vmatpush.bf16.msra.mxu0 0
        %236 = vmatpush.bf16.msra.mxu0 0
        %237 = vmatpush.bf16.msra.mxu0 0
        %238 = vmatpush.bf16.msra.mxu0 0
        %239 = vmatpush.bf16.msra.mxu0 0
        %240 = vmatpush.bf16.msra.mxu0 0
        %241 = vmatpush.bf16.msra.mxu0 %v228
        %242 = vmatmul.bf16.gmra.mxu0 %v232
        %v243 = vpop.f32.mrf.mxu0
        %v244 = vadd.f32 0.0, %v243
        %v245 = vpop.f32.mrf.mxu0
        %246 = vdwg.mxu0
        %v247 = vld [vmem:[#allocation7] sm:$0xff]
        %v248 = vadd.f32 %v244, %v247
        %249 = vst [vmem:[%s218] sm:$0xff] %v248
        %s250 = sand.u32 %s97, 1
        %s251 = scalar_lea.sflag [#allocation4], %s250
        %s252 = sand.u32 %s97, 1
        %s253 = smul.addr %s252, 8
        %s254 = scalar_lea.vmem [#allocation8], %s253
        // Predicated region
        $region45: #{tpu_custom_call.1} parent=31 // pred_check
          %p255 = pneg %p107
        $region46: #{tpu_custom_call.1} parent=31 // pred_check_branch
          %257 = sbr.rel (%p255) target = $region48
        $region47: #{tpu_custom_call.1} parent=31 // pred_region
          %259 = vsyncadd %s251, 0
          %s260 = smul.addr %s21, 8
          %s261 = scalar_lea.hbm %s3, %s260
          %s263 = sshll.u32 %s254, 4
          %s264 = int_to_ptr.vmem [resolvable:$true] %s263
          %s265 = sshll.u32 %s261, 4
          %s266 = int_to_ptr.hbm [resolvable:$true] %s265
          %268 = dma.vmem_to_hbm [thread:$0]  %s264, 128, %s266, %s251
        $region48: #{tpu_custom_call.1} parent=31 // pred_fallthru
          _
      $region32: #{tpu_custom_call.1} parent=5 // pred_fallthru
        _
      %p269 = scmp.le.s32.totalorder 2, %s16
      // Predicated region
      $region49: #{tpu_custom_call.1} parent=5 // pred_check
        %p270 = pneg %p269
      $region50: #{tpu_custom_call.1} parent=5 // pred_check_branch
        %272 = sbr.rel (%p270) target = $region52
      $region51: #{tpu_custom_call.1} parent=5 // pred_region
        %s273 = ssub.s32 %s16, 2
        // Predicated region
        $region53: #{tpu_custom_call.1} parent=51 // pred_check
          %p274 = pneg %p113
        $region54: #{tpu_custom_call.1} parent=51 // pred_check_branch
          %276 = sbr.rel (%p274) target = $region56
        $region55: #{tpu_custom_call.1} parent=51 // pred_region
          %s277 = sand.u32 %s98, 1
          %s278 = scalar_lea.sflag [#allocation4], %s277
          %s279 = sand.u32 %s98, 1
          %s280 = smul.addr %s279, 8
          %s281 = scalar_lea.vmem [#allocation8], %s280
          %283 = dma.done %s278, 128
        $region56: #{tpu_custom_call.1} parent=51 // pred_fallthru
          _
      $region52: #{tpu_custom_call.1} parent=5 // pred_fallthru
        _
    $region6: #{tpu_custom_call.1} parent=1 // loop_footer
      %s20 = sadd.s32 1, %s16
    $region7: #{tpu_custom_call.1} parent=1 // loop_footer_branch
      %15 = sbr.rel target = $region3
    $region8: #{tpu_custom_call.1} parent=1 // loop_exit
      _
    %284 = vsyncpa [#allocation3], 1
    %s285 = scalar_lea.sflag [#allocation3], 1
    %286 = vsyncpa %s285, 1
    %287 = vsyncpa [#allocation6], 1
    %288 = vsyncpa [#allocation4], 1
    %s289 = scalar_lea.sflag [#allocation4], 1
    %290 = vsyncpa %s289, 1

</llo_original>
